<compile_context>
chip_gen: v6e
topology: v6e:2x2x1
jax: 0.10.0
libtpu: 0.0.40
codegen_flags: <defaults>
</compile_context>

<pallas_src>
import jax
import jax.numpy as jnp
from jax.experimental import pallas as pl
from jax.experimental.pallas import tpu as pltpu

SMOOTH = 1e-06
_LANE = 128
_MAX_SPATIAL_TILE = 8192  # lanes per spatial tile (multiple of 128)


def _round_up(x, m):
    return (x + m - 1) // m * m


def _dice_sums_kernel(yt_ref, yp_ref, inter_ref, union_ref):
    """Accumulate per-class sum(yt*yp) and sum(yt+yp) across spatial chunks."""
    j = pl.program_id(1)  # spatial-chunk axis (reduction axis, iterates last)

    @pl.when(j == 0)
    def _init():
        inter_ref[...] = jnp.zeros_like(inter_ref)
        union_ref[...] = jnp.zeros_like(union_ref)

    yt = yt_ref[...].astype(jnp.float32)
    yp = yp_ref[...].astype(jnp.float32)

    # Per-class spatial reductions over this chunk.  Fused denominator:
    # sum(yt + yp) replaces sum(yt) + sum(yp) (one fewer XLU reduce).
    inter = jnp.sum(yt * yp, axis=-1, keepdims=True)   # (TNC, 1)
    union = jnp.sum(yt + yp, axis=-1, keepdims=True)   # (TNC, 1)

    # Lane-dense accumulation (all 128 lanes hold the per-class value; the
    # wrapper reads lane 0).  Avoids masked (1,1) partial stores.
    inter_ref[...] += jnp.broadcast_to(inter, inter_ref.shape)
    union_ref[...] += jnp.broadcast_to(union, union_ref.shape)


def weighted_dice_loss(y_true, y_pred, smooth=SMOOTH):
    """y_true, y_pred: (N, C, H, W) arrays (post-activation probabilities)."""
    assert y_true.shape == y_pred.shape
    N, C, H, W = y_true.shape
    NC, HW = N * C, H * W

    yt = y_true.reshape(NC, HW)
    yp = y_pred.reshape(NC, HW)

    # ---- tiling parameters (lane-dense, VMEM-safe across v5e/v6e/v7x) ----
    tnc = min(32, _round_up(NC, 8))          # classes per grid step
    hw_pad = _round_up(HW, _LANE)
    if hw_pad <= _MAX_SPATIAL_TILE:
        hw_tile = hw_pad
    else:
        hw_tile = _MAX_SPATIAL_TILE
        hw_pad = _round_up(HW, hw_tile)
    nc_pad = _round_up(NC, tnc)

    # Zero padding is exact: padded elements/classes contribute 0 to both sums
    # and padded classes are sliced off before the mean.
    if (nc_pad, hw_pad) != (NC, HW):
        yt = jnp.pad(yt, ((0, nc_pad - NC), (0, hw_pad - HW)))
        yp = jnp.pad(yp, ((0, nc_pad - NC), (0, hw_pad - HW)))

    grid = (nc_pad // tnc, hw_pad // hw_tile)

    inter_out, union_out = pl.pallas_call(
        _dice_sums_kernel,
        out_shape=(
            jax.ShapeDtypeStruct((nc_pad, _LANE), jnp.float32),
            jax.ShapeDtypeStruct((nc_pad, _LANE), jnp.float32),
        ),
        grid_spec=pltpu.PrefetchScalarGridSpec(
            num_scalar_prefetch=0,
            grid=grid,
            in_specs=[
                pl.BlockSpec((tnc, hw_tile), lambda i, j: (i, j)),
                pl.BlockSpec((tnc, hw_tile), lambda i, j: (i, j)),
            ],
            out_specs=(
                pl.BlockSpec((tnc, _LANE), lambda i, j: (i, 0)),
                pl.BlockSpec((tnc, _LANE), lambda i, j: (i, 0)),
            ),
        ),
        compiler_params=pltpu.CompilerParams(
            dimension_semantics=("parallel", "arbitrary"),
        ),
    )(yt, yp)

    inter = inter_out[:NC, 0]
    union = union_out[:NC, 0]
    dice = (2.0 * inter + smooth / 2.0) / (union + smooth)
    return 1.0 - jnp.mean(dice)


def _reference(y_true, y_pred, smooth=SMOOTH):
    # Pure-JAX reference mirroring the PyTorch module exactly.
    yt = y_true.astype(jnp.float32)
    yp = y_pred.astype(jnp.float32)
    intersection = 2.0 * jnp.sum(yt * yp, axis=(-2, -1)) + smooth / 2.0
    union = jnp.sum(yt, axis=(-2, -1)) + jnp.sum(yp, axis=(-2, -1)) + smooth
    return 1.0 - jnp.mean(intersection / union)


if __name__ == "__main__":
    key = jax.random.PRNGKey(0)
    k1, k2 = jax.random.split(key)

    N, C, H, W = 2, 4, 16, 16
    # y_pred: post-softmax probabilities over channel dim; y_true: one-hot labels.
    logits = jax.random.normal(k1, (N, C, H, W), dtype=jnp.float32)
    y_pred = jax.nn.softmax(logits, axis=1)
    labels = jax.random.randint(k2, (N, H, W), 0, C)
    y_true = jax.nn.one_hot(labels, C, dtype=jnp.float32).transpose(0, 3, 1, 2)

    loss = jax.block_until_ready(weighted_dice_loss(y_true, y_pred))
    ref = jax.block_until_ready(_reference(y_true, y_pred))

    assert jnp.allclose(loss, ref, rtol=1e-5, atol=1e-6), (loss, ref)
    print("KERNEL_OK")
</pallas_src>

<mosaic_0001>
module attributes {stable_mosaic.version = 11 : i64} {
  func.func @_dice_sums_kernel(%arg0: i32, %arg1: i32, %arg2: memref<8x256xf32, #tpu.memory_space<vmem>>, %arg3: memref<8x256xf32, #tpu.memory_space<vmem>>, %arg4: memref<8x128xf32, #tpu.memory_space<vmem>>, %arg5: memref<8x128xf32, #tpu.memory_space<vmem>>) attributes {dimension_semantics = [#tpu.dimension_semantics<parallel>, #tpu.dimension_semantics<arbitrary>], iteration_bounds = array<i64: 1, 1>, scalar_prefetch = 0 : i64, scratch_operands = 0 : i64, tpu.core_type = #tpu.core_type<tc>, window_params = [{transform_indices = @transform_0, window_bounds = array<i64: 8, 256>}, {transform_indices = @transform_1, window_bounds = array<i64: 8, 256>}, {transform_indices = @transform_2, window_bounds = array<i64: 8, 128>}, {transform_indices = @transform_3, window_bounds = array<i64: 8, 128>}]} {
    %c0_i32 = arith.constant 0 : i32
    %0 = arith.cmpi eq, %arg1, %c0_i32 : i32
    %1 = arith.extui %0 : i1 to i32
    %c0_i32_0 = arith.constant 0 : i32
    %2 = arith.cmpi ne, %1, %c0_i32_0 : i32
    scf.if %2 {
      %cst_13 = arith.constant 0.000000e+00 : f32
      %21 = vector.broadcast %cst_13 : f32 to vector<8x128xf32>
      %c0_14 = arith.constant 0 : index
      %c0_15 = arith.constant 0 : index
      %22 = vector.load %arg4[%c0_14, %c0_15] : memref<8x128xf32, #tpu.memory_space<vmem>>, vector<8x128xf32>
      tpu.vector_store %arg4[%c0_14, %c0_15], %21 {strides = array<i32>} : memref<8x128xf32, #tpu.memory_space<vmem>>, vector<8x128xf32>,
      %cst_16 = arith.constant 0.000000e+00 : f32
      %23 = vector.broadcast %cst_16 : f32 to vector<8x128xf32>
      %c0_17 = arith.constant 0 : index
      %c0_18 = arith.constant 0 : index
      %24 = vector.load %arg5[%c0_17, %c0_18] : memref<8x128xf32, #tpu.memory_space<vmem>>, vector<8x128xf32>
      tpu.vector_store %arg5[%c0_17, %c0_18], %23 {strides = array<i32>} : memref<8x128xf32, #tpu.memory_space<vmem>>, vector<8x128xf32>,
    } else {
    }
    %c0 = arith.constant 0 : index
    %c0_1 = arith.constant 0 : index
    %3 = vector.load %arg2[%c0, %c0_1] : memref<8x256xf32, #tpu.memory_space<vmem>>, vector<8x256xf32>
    %c0_2 = arith.constant 0 : index
    %c0_3 = arith.constant 0 : index
    %4 = vector.load %arg3[%c0_2, %c0_3] : memref<8x256xf32, #tpu.memory_space<vmem>>, vector<8x256xf32>
    %5 = arith.mulf %3, %4 : vector<8x256xf32>
    %cst = arith.constant dense<0.000000e+00> : vector<8xf32>
    %6 = vector.multi_reduction <add>, %5, %cst [1] : vector<8x256xf32> to vector<8xf32>
    %7 = vector.shape_cast %6 : vector<8xf32> to vector<8x1xf32>
    %8 = arith.addf %3, %4 : vector<8x256xf32>
    %cst_4 = arith.constant dense<0.000000e+00> : vector<8xf32>
    %9 = vector.multi_reduction <add>, %8, %cst_4 [1] : vector<8x256xf32> to vector<8xf32>
    %10 = vector.shape_cast %9 : vector<8xf32> to vector<8x1xf32>
    %c0_5 = arith.constant 0 : index
    %c0_6 = arith.constant 0 : index
    %11 = vector.load %arg4[%c0_5, %c0_6] : memref<8x128xf32, #tpu.memory_space<vmem>>, vector<8x128xf32>
    %12 = vector.shape_cast %7 : vector<8x1xf32> to vector<8x1xf32>
    %13 = vector.broadcast %12 : vector<8x1xf32> to vector<8x128xf32>
    %14 = arith.addf %11, %13 : vector<8x128xf32>
    %c0_7 = arith.constant 0 : index
    %c0_8 = arith.constant 0 : index
    %15 = vector.load %arg4[%c0_7, %c0_8] : memref<8x128xf32, #tpu.memory_space<vmem>>, vector<8x128xf32>
    tpu.vector_store %arg4[%c0_7, %c0_8], %14 {strides = array<i32>} : memref<8x128xf32, #tpu.memory_space<vmem>>, vector<8x128xf32>,
    %c0_9 = arith.constant 0 : index
    %c0_10 = arith.constant 0 : index
    %16 = vector.load %arg5[%c0_9, %c0_10] : memref<8x128xf32, #tpu.memory_space<vmem>>, vector<8x128xf32>
    %17 = vector.shape_cast %10 : vector<8x1xf32> to vector<8x1xf32>
    %18 = vector.broadcast %17 : vector<8x1xf32> to vector<8x128xf32>
    %19 = arith.addf %16, %18 : vector<8x128xf32>
    %c0_11 = arith.constant 0 : index
    %c0_12 = arith.constant 0 : index
    %20 = vector.load %arg5[%c0_11, %c0_12] : memref<8x128xf32, #tpu.memory_space<vmem>>, vector<8x128xf32>
    tpu.vector_store %arg5[%c0_11, %c0_12], %19 {strides = array<i32>} : memref<8x128xf32, #tpu.memory_space<vmem>>, vector<8x128xf32>,
    return
  }
  func.func @transform_0(%arg0: i32, %arg1: i32) -> (i32, i32) {
    %c0_i32 = arith.constant 0 : i32
    return %arg0, %arg1 : i32, i32
  }
  func.func @transform_1(%arg0: i32, %arg1: i32) -> (i32, i32) {
    %c0_i32 = arith.constant 0 : i32
    return %arg0, %arg1 : i32, i32
  }
  func.func @transform_2(%arg0: i32, %arg1: i32) -> (i32, i32) {
    %c0_i32 = arith.constant 0 : i32
    %c0_i32_0 = arith.constant 0 : i32
    return %arg0, %c0_i32 : i32, i32
  }
  func.func @transform_3(%arg0: i32, %arg1: i32) -> (i32, i32) {
    %c0_i32 = arith.constant 0 : i32
    %c0_i32_0 = arith.constant 0 : i32
    return %arg0, %c0_i32 : i32, i32
  }
}

</mosaic_0001>

<llo_original>
// kernel: tpu_custom_call.1
$region0: #{tpu_custom_call.1}
  #allocation0 [shape = 'u32[]', space=smem, size = 0x4, offset = 0x4, fixed_abs, tag = 'smem constant byte address 0x4 - core index']
  #allocation1 [shape = 'u32[144,128]{1,0:T(1,128)}', space=vmem, size = 0x12000, scoped, tag = 'internal scratch']
  %s0 = inlined_call_operand.hbm [shape: f32[8,256], index: 0, kind: input, shape index: {}]
  %s1 = inlined_call_operand.hbm [shape: f32[8,256], index: 1, kind: input, shape index: {}]
  %s2 = inlined_call_operand.hbm [shape: f32[8,128], index: 2, kind: output, shape index: {0}]
  %s3 = inlined_call_operand.hbm [shape: f32[8,128], index: 3, kind: output, shape index: {1}]
  %4 = xla_tuple %s2, %s3
  %s5 = sld [smem:[#allocation0]]
  $region38: #{tpu_custom_call.1} parent=0
    _
  %s7 = ssub.s32 1, %s5
  %s8 = scalar_select 0, %s7, %s5
  $region1: #{tpu_custom_call.1} parent=0
    #allocation2 [shape = 'u8[8192]{0}', space=vmem, size = 0x2000, scoped, tag = 'input window, operand 0, single buffered']
    #allocation3 [shape = 's32[1]{0}', space=sflag, size = 0x4, scoped, tag = 'scoped memory for tpu_custom_call.1']
    #allocation4 [shape = 's32[1]{0}', space=sflag, size = 0x4, scoped, tag = 'scoped memory for tpu_custom_call.1']
    #allocation5 [shape = 'u8[8192]{0}', space=vmem, size = 0x2000, scoped, tag = 'input window, operand 1, single buffered']
    #allocation6 [shape = 's32[1]{0}', space=sflag, size = 0x4, scoped, tag = 'scoped memory for tpu_custom_call.1']
    #allocation7 [shape = 'u8[4096]{0}', space=vmem, size = 0x1000, scoped, tag = 'output window, operand 0, single buffered']
    #allocation8 [shape = 'u8[4096]{0}', space=vmem, size = 0x1000, scoped, tag = 'output window, operand 1, single buffered']
    #allocation9 [shape = 's32[1]{0}', space=sflag, size = 0x4, scoped, tag = 'scoped memory for tpu_custom_call.1']
    %9 = vsyncpa [#allocation3], 0
    %10 = vsyncpa [#allocation6], 0
    %11 = vsyncpa [#allocation4], 0
    %12 = vsyncpa [#allocation9], 0
    // Predicated region
    $region2: #{tpu_custom_call.1} parent=1 // pred_check
      _
    $region3: #{tpu_custom_call.1} parent=1 // pred_check_branch
      %14 = sbr.rel (0) target = $region5
    $region4: #{tpu_custom_call.1} parent=1 // pred_region
      %s16 = ssub.s32 256, 256
      %17 = vsyncadd [#allocation3], %s16
      %s19 = sshll.u32 [#allocation2], 4
      %s20 = int_to_ptr.vmem [resolvable:$true] %s19
      %22 = dma.hbm_to_vmem [thread:$0]  %s0, 256, %s20, [#allocation3]
    $region5: #{tpu_custom_call.1} parent=1 // pred_fallthru
      _
    // Predicated region
    $region6: #{tpu_custom_call.1} parent=1 // pred_check
      _
    $region7: #{tpu_custom_call.1} parent=1 // pred_check_branch
      %24 = sbr.rel (0) target = $region9
    $region8: #{tpu_custom_call.1} parent=1 // pred_region
      %s26 = ssub.s32 256, 256
      %27 = vsyncadd [#allocation6], %s26
      %s29 = sshll.u32 [#allocation5], 4
      %s30 = int_to_ptr.vmem [resolvable:$true] %s29
      %32 = dma.hbm_to_vmem [thread:$0]  %s1, 256, %s30, [#allocation6]
    $region9: #{tpu_custom_call.1} parent=1 // pred_fallthru
      _
    // Predicated region
    $region10: #{tpu_custom_call.1} parent=1 // pred_check
      _
    $region11: #{tpu_custom_call.1} parent=1 // pred_check_branch
      %34 = sbr.rel (0) target = $region13
    $region12: #{tpu_custom_call.1} parent=1 // pred_region
      %35 = dma.done [#allocation3], 256
    $region13: #{tpu_custom_call.1} parent=1 // pred_fallthru
      _
    // Predicated region
    $region14: #{tpu_custom_call.1} parent=1 // pred_check
      _
    $region15: #{tpu_custom_call.1} parent=1 // pred_check_branch
      %37 = sbr.rel (0) target = $region17
    $region16: #{tpu_custom_call.1} parent=1 // pred_region
      %38 = dma.done [#allocation6], 256
    $region17: #{tpu_custom_call.1} parent=1 // pred_fallthru
      _
    %p39 = scmp.eq.s32.totalorder 0, 0
    // Predicated region
    $region18: #{tpu_custom_call.1} parent=1 // pred_check
      %p40 = pneg %p39
    $region19: #{tpu_custom_call.1} parent=1 // pred_check_branch
      %42 = sbr.rel (%p40) target = $region21
    $region20: #{tpu_custom_call.1} parent=1 // pred_region
      %43 = vst [vmem:[#allocation7] sm:$0xff] 0.0
      %44 = vst [vmem:[#allocation8] sm:$0xff] 0.0
    $region21: #{tpu_custom_call.1} parent=1 // pred_fallthru
      _
    %v45 = vld [vmem:[#allocation2] sm:$0xff]
    %v46 = vld [vmem:[#allocation2 + $0x8] sm:$0xff]
    %v47 = vld [vmem:[#allocation5] sm:$0xff]
    %v48 = vld [vmem:[#allocation5 + $0x8] sm:$0xff]
    %v49 = vmul.f32 %v45, %v47
    %v50 = vmul.f32 %v46, %v48
    %v51 = vadd.f32 %v49, %v50
    %52 = vadd.xlane.f32.xlu0 %v51
    %v53 = vpop.xlane.xlu0 %52
    %v54 = vadd.f32 %v45, %v47
    %v55 = vadd.f32 %v46, %v48
    %v56 = vadd.f32 %v54, %v55
    %57 = vadd.xlane.f32.xlu0 %v56
    %v58 = vpop.xlane.xlu0 %57
    %v59 = vld [vmem:[#allocation7] sm:$0xff]
    %v60 = vadd.f32 %v59, %v53
    %61 = vst [vmem:[#allocation7] sm:$0xff] %v60
    %v62 = vld [vmem:[#allocation8] sm:$0xff]
    %v63 = vadd.f32 %v62, %v58
    %64 = vst [vmem:[#allocation8] sm:$0xff] %v63
    // Predicated region
    $region22: #{tpu_custom_call.1} parent=1 // pred_check
      _
    $region23: #{tpu_custom_call.1} parent=1 // pred_check_branch
      %66 = sbr.rel (0) target = $region25
    $region24: #{tpu_custom_call.1} parent=1 // pred_region
      %s68 = ssub.s32 128, 128
      %69 = vsyncadd [#allocation4], %s68
      %s71 = sshll.u32 [#allocation7], 4
      %s72 = int_to_ptr.vmem [resolvable:$true] %s71
      %74 = dma.vmem_to_hbm [thread:$0]  %s72, 128, %s2, [#allocation4]
    $region25: #{tpu_custom_call.1} parent=1 // pred_fallthru
      _
    // Predicated region
    $region26: #{tpu_custom_call.1} parent=1 // pred_check
      _
    $region27: #{tpu_custom_call.1} parent=1 // pred_check_branch
      %76 = sbr.rel (0) target = $region29
    $region28: #{tpu_custom_call.1} parent=1 // pred_region
      %s78 = ssub.s32 128, 128
      %79 = vsyncadd [#allocation9], %s78
      %s81 = sshll.u32 [#allocation8], 4
      %s82 = int_to_ptr.vmem [resolvable:$true] %s81
      %84 = dma.vmem_to_hbm [thread:$0]  %s82, 128, %s3, [#allocation9]
    $region29: #{tpu_custom_call.1} parent=1 // pred_fallthru
      _
    // Predicated region
    $region30: #{tpu_custom_call.1} parent=1 // pred_check
      _
    $region31: #{tpu_custom_call.1} parent=1 // pred_check_branch
      %86 = sbr.rel (0) target = $region33
    $region32: #{tpu_custom_call.1} parent=1 // pred_region
      %87 = dma.done [#allocation4], 128
    $region33: #{tpu_custom_call.1} parent=1 // pred_fallthru
      _
    // Predicated region
    $region34: #{tpu_custom_call.1} parent=1 // pred_check
      _
    $region35: #{tpu_custom_call.1} parent=1 // pred_check_branch
      %89 = sbr.rel (0) target = $region37
    $region36: #{tpu_custom_call.1} parent=1 // pred_region
      %90 = dma.done [#allocation9], 128
    $region37: #{tpu_custom_call.1} parent=1 // pred_fallthru
      _
    %91 = vsyncpa [#allocation3], 1
    %92 = vsyncpa [#allocation6], 1
    %93 = vsyncpa [#allocation4], 1
    %94 = vsyncpa [#allocation9], 1

</llo_original>
